<compile_context>
chip_gen: v5e
topology: v5e:2x2
jax: 0.10.0
libtpu: 0.0.40
codegen_flags: <defaults>
</compile_context>

<pallas_src>
import functools

import jax
import jax.numpy as jnp
from jax import lax
from jax.experimental import pallas as pl
from jax.experimental.pallas import tpu as pltpu

_MiB = 1024 * 1024


def _pixelnorm_kernel(x_ref, o_ref, *, eps, inv_c):
    # Channel axis is always the second-to-last axis of the block:
    #   spatial-tiled path : block (C, T)        (leading batch dim squeezed)
    #   batch-packed path  : block (Nb, C, HW)
    x = x_ref[...]
    xf = x.astype(jnp.float32)                     # reduce in f32
    ss = jnp.sum(xf * xf, axis=-2, keepdims=True)  # sum of squares over C
    inv = lax.rsqrt(ss * inv_c + eps)              # EUP rsqrt, 1/C folded in
    # Scale in the native dtype so no f32 copy of the full tile stays live
    # past the reduction (matters for bf16 / fp8 inputs).
    o_ref[...] = (x * inv.astype(x.dtype)).astype(o_ref.dtype)


def _vmem_physical_bytes():
    try:
        return int(pltpu.get_tpu_info().vmem_capacity_bytes)
    except Exception:
        return 128 * _MiB  # conservative default (v5e/v6e-sized part)


def _per_element_bytes(itemsize):
    # Double-buffered input + double-buffered output, plus (for sub-32-bit
    # inputs) ~2 f32-sized tiles of live upcast intermediates in the reduce.
    extra_f32 = 0 if itemsize >= 4 else 2 * 4
    return 2 * itemsize + 2 * itemsize + extra_f32


def _divisors_desc(m):
    ds = set()
    i = 1
    while i * i <= m:
        if m % i == 0:
            ds.add(i)
            ds.add(m // i)
        i += 1
    return sorted(ds, reverse=True)


def _choose_blocking(N, C, HW, itemsize, budget):
    """Returns ("spatial", T) or ("batch", Nb)."""
    per_elem = _per_element_bytes(itemsize)

    if HW % 128 == 0:
        # Largest lane-dense (multiple-of-128) divisor of HW under the budget.
        m = HW // 128
        best = None
        for d in _divisors_desc(m):
            t = 128 * d
            if C * t * per_elem <= budget:
                best = t
                break
        if best is None:
            best = 128  # huge C: smallest legal lane-dense tile; raise vmem limit
        # Keep both v7x TensorCores fed: if the whole problem would be a
        # single grid step, split the spatial axis so the grid has >= 2 steps.
        if N * (HW // best) < 2:
            for d in _divisors_desc(m):
                t = 128 * d
                if HW // t >= 2 and C * t * per_elem <= budget:
                    best = t
                    break
        return "spatial", best

    # Small / non-128-divisible HW: pack batch elements per block so each
    # DMA is a useful size instead of a tiny masked store per grid step.
    best_nb = 1
    for nb in _divisors_desc(N):
        if nb * C * HW * per_elem <= budget and (N // nb >= 2 or N == 1):
            best_nb = nb
            break
    return "batch", best_nb


def pixel_norm(x, epsilon=1e-08):
    """PGGAN pixel norm: x * rsqrt(mean(x**2, axis=1, keepdims=True) + eps).

    x: (N, C, H, W) array.  Returns the same shape/dtype.
    """
    N, C, H, W = x.shape
    HW = H * W
    itemsize = jnp.dtype(x.dtype).itemsize

    cap = _vmem_physical_bytes()
    # Generation-aware pipeline-buffer budget: ~24 MiB on v7x (64 MiB part),
    # ~28 MiB on v5e/v6e (128 MiB parts).
    budget = min(max(cap // 2 - 8 * _MiB, 8 * _MiB), 28 * _MiB)

    mode, blk = _choose_blocking(N, C, HW, itemsize, budget)
    per_elem = _per_element_bytes(itemsize)

    x2d = x.reshape(N, C, HW)
    kernel = functools.partial(
        _pixelnorm_kernel, eps=float(epsilon), inv_c=1.0 / float(C))

    if mode == "spatial":
        T = blk
        block_elems = C * T
        grid = (N, HW // T)
        # With near-zero compute per block the DMA latency is fully exposed;
        # if HW divisibility forces many small blocks and VMEM has slack,
        # triple-buffer the input to hide DMA issue/turnaround jitter.
        use_buf3 = (C * T * itemsize <= 512 * 1024
                    and HW // T > 4
                    and block_elems * (per_elem + itemsize) <= budget)
        if use_buf3:
            in_spec = pl.BlockSpec((pl.Squeezed(), C, T),
                                   lambda n, s: (n, 0, s),
                                   pipeline_mode=pl.Buffered(3))
        else:
            in_spec = pl.BlockSpec((pl.Squeezed(), C, T),
                                   lambda n, s: (n, 0, s))
        out_spec = pl.BlockSpec((pl.Squeezed(), C, T), lambda n, s: (n, 0, s))
        dims = ("parallel", "parallel")
        footprint = block_elems * per_elem + (block_elems * itemsize if use_buf3 else 0)
    else:
        Nb = blk
        block_elems = Nb * C * HW
        grid = (N // Nb,)
        in_spec = pl.BlockSpec((Nb, C, HW), lambda b: (b, 0, 0))
        out_spec = pl.BlockSpec((Nb, C, HW), lambda b: (b, 0, 0))
        dims = ("parallel",)
        footprint = block_elems * per_elem
        # TODO(synk): if even Nb=1 exceeds physical VMEM (huge C*HW with HW not
        # a multiple of 128), spatial edge-block masking would be needed.

    # Explicit scoped-VMEM limit so the chosen tile compiles on all generations
    # (v5e default is only 16 MiB), clamped to the physical capacity.
    vmem_limit = int(min(cap, max(footprint + 4 * _MiB, 16 * _MiB)))

    cost = pl.CostEstimate(
        flops=3 * N * C * HW,            # square, sum, scale
        transcendentals=N * HW,          # rsqrt per pixel
        bytes_accessed=2 * N * C * HW * itemsize,
    )

    out = pl.pallas_call(
        kernel,
        out_shape=jax.ShapeDtypeStruct((N, C, HW), x.dtype),
        grid_spec=pltpu.PrefetchScalarGridSpec(
            num_scalar_prefetch=0,
            grid=grid,
            in_specs=[in_spec],
            out_specs=out_spec,
        ),
        compiler_params=pltpu.CompilerParams(
            dimension_semantics=dims,
            vmem_limit_bytes=vmem_limit),
        cost_estimate=cost,
    )(x2d)

    return out.reshape(N, C, H, W)


def pixel_norm_ref(x, epsilon=1e-08):
    # pure-JAX reference matching the PyTorch forward
    return x * lax.rsqrt(jnp.mean(x * x, axis=1, keepdims=True) + epsilon)


if __name__ == "__main__":
    key = jax.random.PRNGKey(0)

    # Main shape: exercises the spatial-tiled (lane-dense) path.
    x = jax.random.normal(key, (2, 4, 16, 16), dtype=jnp.float32)
    y = jax.block_until_ready(pixel_norm(x))
    y_ref = pixel_norm_ref(x)
    assert y.shape == x.shape and y.dtype == x.dtype
    assert jnp.allclose(y, y_ref, atol=1e-5, rtol=1e-5), "mismatch (spatial path)"

    # Small-HW shape: exercises the batch-packed path (HW = 16 < 128).
    x2 = jax.random.normal(jax.random.PRNGKey(1), (8, 4, 4, 4), dtype=jnp.float32)
    y2 = jax.block_until_ready(pixel_norm(x2))
    y2_ref = pixel_norm_ref(x2)
    assert y2.shape == x2.shape and y2.dtype == x2.dtype
    assert jnp.allclose(y2, y2_ref, atol=1e-5, rtol=1e-5), "mismatch (batch path)"

    print("KERNEL_OK")
</pallas_src>

<mosaic_0001>
module attributes {stable_mosaic.version = 11 : i64} {
  func.func @_pixelnorm_kernel(%arg0: i32, %arg1: i32, %arg2: memref<1x4x256xf32, #tpu.memory_space<vmem>>, %arg3: memref<1x4x256xf32, #tpu.memory_space<vmem>>) attributes {dimension_semantics = [#tpu.dimension_semantics<parallel>, #tpu.dimension_semantics<parallel>], iteration_bounds = array<i64: 2, 1>, scalar_prefetch = 0 : i64, scratch_operands = 0 : i64, tpu.core_type = #tpu.core_type<tc>, window_params = [{transform_indices = @transform_0, window_bounds = array<i64: 1, 4, 256>}, {transform_indices = @transform_1, window_bounds = array<i64: 1, 4, 256>}]} {
    %c0 = arith.constant 0 : index
    %c0_0 = arith.constant 0 : index
    %c0_1 = arith.constant 0 : index
    %0 = vector.load %arg2[%c0, %c0_0, %c0_1] : memref<1x4x256xf32, #tpu.memory_space<vmem>>, vector<1x4x256xf32>
    %1 = vector.shape_cast %0 : vector<1x4x256xf32> to vector<4x256xf32>
    %2 = arith.mulf %1, %1 : vector<4x256xf32>
    %cst = arith.constant dense<0.000000e+00> : vector<256xf32>
    %3 = vector.multi_reduction <add>, %2, %cst [0] : vector<4x256xf32> to vector<256xf32>
    %4 = vector.shape_cast %3 : vector<256xf32> to vector<1x256xf32>
    %cst_2 = arith.constant 2.500000e-01 : f32
    %5 = vector.broadcast %cst_2 : f32 to vector<1x256xf32>
    %6 = arith.mulf %4, %5 : vector<1x256xf32>
    %cst_3 = arith.constant 9.99999993E-9 : f32
    %7 = vector.broadcast %cst_3 : f32 to vector<1x256xf32>
    %8 = arith.addf %6, %7 : vector<1x256xf32>
    %9 = math.rsqrt %8 : vector<1x256xf32>
    %10 = vector.broadcast %9 : vector<1x256xf32> to vector<4x256xf32>
    %11 = arith.mulf %1, %10 : vector<4x256xf32>
    %c0_4 = arith.constant 0 : index
    %c0_5 = arith.constant 0 : index
    %c0_6 = arith.constant 0 : index
    %12 = vector.load %arg3[%c0_4, %c0_5, %c0_6] : memref<1x4x256xf32, #tpu.memory_space<vmem>>, vector<1x4x256xf32>
    %13 = vector.shape_cast %12 : vector<1x4x256xf32> to vector<4x256xf32>
    %14 = vector.shape_cast %11 : vector<4x256xf32> to vector<1x4x256xf32>
    tpu.vector_store %arg3[%c0_4, %c0_5, %c0_6], %14 {strides = array<i32>} : memref<1x4x256xf32, #tpu.memory_space<vmem>>, vector<1x4x256xf32>,
    return
  }
  func.func @transform_0(%arg0: i32, %arg1: i32) -> (i32, i32, i32) {
    %c0_i32 = arith.constant 0 : i32
    %c0_i32_0 = arith.constant 0 : i32
    return %arg0, %c0_i32, %arg1 : i32, i32, i32
  }
  func.func @transform_1(%arg0: i32, %arg1: i32) -> (i32, i32, i32) {
    %c0_i32 = arith.constant 0 : i32
    %c0_i32_0 = arith.constant 0 : i32
    return %arg0, %c0_i32, %arg1 : i32, i32, i32
  }
}

</mosaic_0001>

<llo_original>
// kernel: tpu_custom_call.1
$region0: #{tpu_custom_call.1}
  #allocation0 [shape = 'u32[]', space=smem, size = 0x4, offset = 0x4, fixed_abs, tag = 'smem constant byte address 0x4 - core index']
  #allocation1 [shape = 'u32[72,128]{1,0:T(1,128)}', space=vmem, size = 0x9000, scoped, tag = 'internal scratch']
  %s0 = inlined_call_operand.hbm [shape: f32[2,4,256], index: 0, kind: input, shape index: {}]
  %s1 = inlined_call_operand.hbm [shape: f32[2,4,256], index: 1, kind: output, shape index: {}]
  %s2 = sld [smem:[#allocation0]]
  $region41: #{tpu_custom_call.1} parent=0
    _
  %s4 = ssub.s32 1, %s2
  %s5 = scalar_select 0, %s4, %s2
  $region1: #{tpu_custom_call.1} parent=0
    #allocation2 [shape = 'u8[8192]{0}', space=vmem, size = 0x2000, scoped, tag = 'input window, operand 0']
    #allocation3 [shape = 's32[2]{0}', space=sflag, size = 0x8, scoped, tag = 'scoped memory for tpu_custom_call.1']
    #allocation4 [shape = 's32[2]{0}', space=sflag, size = 0x8, scoped, tag = 'scoped memory for tpu_custom_call.1']
    #allocation5 [shape = 'u8[8192]{0}', space=vmem, size = 0x2000, scoped, tag = 'output window, operand 0']
    %6 = vsyncpa [#allocation3], 0
    %s7 = scalar_lea.sflag [#allocation3], 1
    %8 = vsyncpa %s7, 0
    %9 = vsyncpa [#allocation4], 0
    %s10 = scalar_lea.sflag [#allocation4], 1
    %11 = vsyncpa %s10, 0
    loop: start=0, step=1, limit=4
    $region2: #{tpu_custom_call.1} parent=1 // loop_pre_header
      _
    $region3: #{tpu_custom_call.1} parent=1 // loop_header
      %s13 = sphi 0, %s17
      %p14 = scmp.ge.s32.totalorder %s13, 4
      %s20 = sphi 0, %s32
      %s21 = sphi 0, %s28
      %s22 = sphi 0, %s20
      %s23 = sphi 0, %s21
      %s24 = sphi 0, %s22
      %s25 = sphi 0, %s23
      %s37 = sphi 0, %s39
      %s40 = sphi 0, %s37
      %s41 = sphi 0, %s40
      %s57 = sphi 0, %s41
      %s65 = sphi 0, %s67
      %s68 = sphi 0, %s65
      %s69 = sphi 0, %s68
      %s85 = sphi 0, %s69
    $region4: #{tpu_custom_call.1} parent=1 // loop_header_branch
      %16 = sbr.rel (%p14) target = $region8
    $region5: #{tpu_custom_call.1} parent=1 // loop_body
      %s18 = ssub.s32 %s13, 1
      %s19 = ssub.s32 %s13, 2
      %s26 = sadd.s32 1, %s21
      %p27 = scmp.ge.s32.totalorder %s26, 1
      %s28 = scalar_select %p27, 0, %s26
      %s29 = sadd.s32 1, %s20
      %s30 = scalar_select %p27, %s29, %s20
      %p31 = scmp.ge.s32.totalorder %s30, 2
      %s32 = scalar_select %p31, 0, %s30
      %s33 = ssub.s32 %s20, %s32
      %s34 = ssub.s32 %s21, %s28
      %s35 = sor.u32 %s33, %s34
      %p36 = scmp.eq.s32.totalorder %s35, 0
      %s38 = sadd.s32 %s37, 1
      %s39 = scalar_select %p36, %s37, %s38
      %p42 = pneg %p36
      %p43 = scmp.eq.s32.totalorder %s13, 1
      %p44 = por %p42, %p43
      %p45 = scmp.ne.s32.totalorder %s37, %s40
      %p46 = scmp.eq.s32.totalorder %s13, 0
      %p47 = por %p45, %p46
      %p48 = scmp.ne.s32.totalorder %s37, %s40
      %p49 = scmp.eq.s32.totalorder %s18, 1
      %p50 = por %p48, %p49
      %p51 = scmp.ne.s32.totalorder %s40, %s41
      %p52 = scmp.eq.s32.totalorder %s18, 0
      %p53 = por %p51, %p52
      %p54 = scmp.ne.s32.totalorder %s40, %s41
      %p55 = scmp.eq.s32.totalorder %s19, 1
      %p56 = por %p54, %p55
      %p58 = scmp.ne.s32.totalorder %s41, %s57
      %p59 = scmp.eq.s32.totalorder %s19, 0
      %p60 = por %p58, %p59
      %s61 = ssub.s32 %s20, %s32
      %s62 = ssub.s32 %s21, %s28
      %s63 = sor.u32 %s61, %s62
      %p64 = scmp.eq.s32.totalorder %s63, 0
      %s66 = sadd.s32 %s65, 1
      %s67 = scalar_select %p64, %s65, %s66
      %p70 = pneg %p64
      %p71 = scmp.eq.s32.totalorder %s13, 1
      %p72 = por %p70, %p71
      %p73 = scmp.ne.s32.totalorder %s65, %s68
      %p74 = scmp.eq.s32.totalorder %s13, 0
      %p75 = por %p73, %p74
      %p76 = scmp.ne.s32.totalorder %s65, %s68
      %p77 = scmp.eq.s32.totalorder %s18, 1
      %p78 = por %p76, %p77
      %p79 = scmp.ne.s32.totalorder %s68, %s69
      %p80 = scmp.eq.s32.totalorder %s18, 0
      %p81 = por %p79, %p80
      %p82 = scmp.ne.s32.totalorder %s68, %s69
      %p83 = scmp.eq.s32.totalorder %s19, 1
      %p84 = por %p82, %p83
      %p86 = scmp.ne.s32.totalorder %s69, %s85
      %p87 = scmp.eq.s32.totalorder %s19, 0
      %p88 = por %p86, %p87
      %p89 = scmp.le.s32.totalorder 1, %s13
      %p90 = scmp.lt.s32.totalorder %s13, 3
      %p91 = pnand %p89, %p90
      %p92 = pneg %p91
      // Predicated region
      $region9: #{tpu_custom_call.1} parent=5 // pred_check
        _
      $region10: #{tpu_custom_call.1} parent=5 // pred_check_branch
        %94 = sbr.rel (%p91) target = $region12
      $region11: #{tpu_custom_call.1} parent=5 // pred_region
        %s95 = ssub.s32 %s13, 1
      $region12: #{tpu_custom_call.1} parent=5 // pred_fallthru
        _
      %p96 = scmp.lt.s32.totalorder %s13, 2
      // Predicated region
      $region13: #{tpu_custom_call.1} parent=5 // pred_check
        %p97 = pneg %p96
      $region14: #{tpu_custom_call.1} parent=5 // pred_check_branch
        %99 = sbr.rel (%p97) target = $region16
      $region15: #{tpu_custom_call.1} parent=5 // pred_region
        // Predicated region
        $region17: #{tpu_custom_call.1} parent=15 // pred_check
          %p100 = pneg %p47
        $region18: #{tpu_custom_call.1} parent=15 // pred_check_branch
          %102 = sbr.rel (%p100) target = $region20
        $region19: #{tpu_custom_call.1} parent=15 // pred_region
          %s103 = sand.u32 %s37, 1
          %s104 = scalar_lea.sflag [#allocation3], %s103
          %s105 = sand.u32 %s37, 1
          %s106 = smul.addr %s105, 8
          %s107 = scalar_lea.vmem [#allocation2], %s106
          %s108 = smul.u32 2, %s21
          %110 = vsyncadd %s104, 0
          %s111 = smul.addr %s20, 2
          %s112 = sadd.s32 %s108, %s111
          %s113 = smul.addr %s112, 4
          %s114 = scalar_lea.hbm %s0, %s113
          %s116 = sshll.u32 %s114, 4
          %s117 = int_to_ptr.hbm [resolvable:$true] %s116
          %s118 = sshll.u32 %s107, 4
          %s119 = int_to_ptr.vmem [resolvable:$true] %s118
          %121 = dma.hbm_to_vmem [thread:$0]  %s117, 128, %s119, %s104
        $region20: #{tpu_custom_call.1} parent=15 // pred_fallthru
          _
      $region16: #{tpu_custom_call.1} parent=5 // pred_fallthru
        _
      %p122 = scmp.le.s32.totalorder 1, %s13
      %p123 = scmp.lt.s32.totalorder %s13, 3
      %p124 = pnand %p122, %p123
      %p125 = pneg %p124
      // Predicated region
      $region21: #{tpu_custom_call.1} parent=5 // pred_check
        _
      $region22: #{tpu_custom_call.1} parent=5 // pred_check_branch
        %127 = sbr.rel (%p124) target = $region24
      $region23: #{tpu_custom_call.1} parent=5 // pred_region
        %s128 = ssub.s32 %s13, 1
        %s129 = sand.u32 %s40, 1
        %s130 = scalar_lea.sflag [#allocation3], %s129
        %s131 = sand.u32 %s40, 1
        %s132 = smul.addr %s131, 8
        %s133 = scalar_lea.vmem [#allocation2], %s132
        // Predicated region
        $region25: #{tpu_custom_call.1} parent=23 // pred_check
          %p134 = pneg %p53
        $region26: #{tpu_custom_call.1} parent=23 // pred_check_branch
          %136 = sbr.rel (%p134) target = $region28
        $region27: #{tpu_custom_call.1} parent=23 // pred_region
          %138 = dma.done %s130, 128
        $region28: #{tpu_custom_call.1} parent=23 // pred_fallthru
          _
        %s139 = sand.u32 %s40, 1
        %s140 = scalar_lea.sflag [#allocation3], %s139
        %s141 = sand.u32 %s40, 1
        %s142 = smul.addr %s141, 8
        %s143 = scalar_lea.vmem [#allocation2], %s142
        %p144 = pneg %p53
        %p145 = pneg %p50
        %p146 = pneg %p81
        %p147 = pneg %p78
        %s148 = sand.u32 %s68, 1
        %s149 = scalar_lea.sflag [#allocation4], %s148
        %s150 = sand.u32 %s68, 1
        %s151 = smul.addr %s150, 8
        %s152 = scalar_lea.vmem [#allocation5], %s151
        %s153 = smul.u32 2, %s23
        %s154 = smul.u32 2, %s23
        %v155 = vld [vmem:[%s133] sm:$0xff]
        %v156 = vmul.f32 %v155, %v155
        %158 = vst [vmem:[#allocation1] ss:$2 sm:$0xff] %v156
        %v159 = vld.sshfl [vmem:[#allocation1] sm:$0xff pattern:$0x75316420]
        %v160 = vld.sshfl [vmem:[#allocation1 + $0x8] sm:$0xff pattern:$0x75316420]
        %vm163 = vcmask 1043456
        %v164 = vsel %vm163, %v159, 0.0
        %v165 = vrot.slane %v164, 4
        %v166 = vadd.f32 %v164, %v165
        %v167 = vrot.slane %v166, 2
        %v168 = vadd.f32 %v166, %v167
        %v169 = vrot.slane %v168, 1
        %v170 = vadd.f32 %v168, %v169
        %v171 = vsel %vm163, %v160, 0.0
        %v172 = vrot.slane %v171, 4
        %v173 = vadd.f32 %v171, %v172
        %v174 = vrot.slane %v173, 2
        %v175 = vadd.f32 %v173, %v174
        %v176 = vrot.slane %v175, 1
        %v177 = vadd.f32 %v175, %v176
        %v178 = vmul.f32 %v170, 0.25
        %v179 = vmul.f32 %v177, 0.25
        %v180 = vadd.f32 %v178, 1e-08
        %v181 = vadd.f32 %v179, 1e-08
        %v182 = vrsqrt.pop %v180
        %v183 = vmul.f32 %v182, %v180
        %v184 = vmul.f32 %v183, %v182
        %v185 = vmul.f32 0.5, %v184
        %v186 = vsub.f32 1.5, %v185
        %v187 = vmul.f32 %v182, %v186
        %vm188 = vweird.f32 %v180
        %vm189 = vweird.f32 %v182
        %vm190 = vmor %vm188, %vm189
        %v191 = vsel %vm190, %v182, %v187
        %v192 = vrsqrt.pop %v181
        %v193 = vmul.f32 %v192, %v181
        %v194 = vmul.f32 %v193, %v192
        %v195 = vmul.f32 0.5, %v194
        %v196 = vsub.f32 1.5, %v195
        %v197 = vmul.f32 %v192, %v196
        %vm198 = vweird.f32 %v181
        %vm199 = vweird.f32 %v192
        %vm200 = vmor %vm198, %vm199
        %v201 = vsel %vm200, %v192, %v197
        %v204 = vrot.slane %v201, 4
        %v205 = vsel %vm163, %v191, %v204
        %v207 = vmul.f32 %v155, %v205
        %208 = vst [vmem:[%s152] sm:$0xff] %v207
        %s209 = sand.u32 %s68, 1
        %s210 = scalar_lea.sflag [#allocation4], %s209
        %s211 = sand.u32 %s68, 1
        %s212 = smul.addr %s211, 8
        %s213 = scalar_lea.vmem [#allocation5], %s212
        // Predicated region
        $region29: #{tpu_custom_call.1} parent=23 // pred_check
          %p214 = pneg %p78
        $region30: #{tpu_custom_call.1} parent=23 // pred_check_branch
          %216 = sbr.rel (%p214) target = $region32
        $region31: #{tpu_custom_call.1} parent=23 // pred_region
          %s217 = smul.u32 2, %s23
          %219 = vsyncadd %s210, 0
          %s220 = smul.addr %s22, 2
          %s221 = sadd.s32 %s217, %s220
          %s222 = smul.addr %s221, 4
          %s223 = scalar_lea.hbm %s1, %s222
          %s225 = sshll.u32 %s213, 4
          %s226 = int_to_ptr.vmem [resolvable:$true] %s225
          %s227 = sshll.u32 %s223, 4
          %s228 = int_to_ptr.hbm [resolvable:$true] %s227
          %230 = dma.vmem_to_hbm [thread:$0]  %s226, 128, %s228, %s210
        $region32: #{tpu_custom_call.1} parent=23 // pred_fallthru
          _
      $region24: #{tpu_custom_call.1} parent=5 // pred_fallthru
        _
      %p231 = scmp.le.s32.totalorder 2, %s13
      // Predicated region
      $region33: #{tpu_custom_call.1} parent=5 // pred_check
        %p232 = pneg %p231
      $region34: #{tpu_custom_call.1} parent=5 // pred_check_branch
        %234 = sbr.rel (%p232) target = $region36
      $region35: #{tpu_custom_call.1} parent=5 // pred_region
        %s235 = ssub.s32 %s13, 2
        // Predicated region
        $region37: #{tpu_custom_call.1} parent=35 // pred_check
          %p236 = pneg %p84
        $region38: #{tpu_custom_call.1} parent=35 // pred_check_branch
          %238 = sbr.rel (%p236) target = $region40
        $region39: #{tpu_custom_call.1} parent=35 // pred_region
          %s239 = sand.u32 %s69, 1
          %s240 = scalar_lea.sflag [#allocation4], %s239
          %s241 = sand.u32 %s69, 1
          %s242 = smul.addr %s241, 8
          %s243 = scalar_lea.vmem [#allocation5], %s242
          %245 = dma.done %s240, 128
        $region40: #{tpu_custom_call.1} parent=35 // pred_fallthru
          _
      $region36: #{tpu_custom_call.1} parent=5 // pred_fallthru
        _
    $region6: #{tpu_custom_call.1} parent=1 // loop_footer
      %s17 = sadd.s32 1, %s13
    $region7: #{tpu_custom_call.1} parent=1 // loop_footer_branch
      %12 = sbr.rel target = $region3
    $region8: #{tpu_custom_call.1} parent=1 // loop_exit
      _
    %246 = vsyncpa [#allocation3], 1
    %s247 = scalar_lea.sflag [#allocation3], 1
    %248 = vsyncpa %s247, 1
    %249 = vsyncpa [#allocation4], 1
    %s250 = scalar_lea.sflag [#allocation4], 1
    %251 = vsyncpa %s250, 1

</llo_original>
